<compile_context>
chip_gen: v5e
topology: v5e:2x2
jax: 0.10.0
libtpu: 0.0.40
codegen_flags: <defaults>
</compile_context>

<pallas_src>
import functools

import jax
import jax.numpy as jnp
from jax.experimental import pallas as pl
from jax.experimental.pallas import tpu as pltpu


_LANE = 128
_NEG_INF = -1e30


def _round_up(n, m):
    return (n + m - 1) // m * m


def _chip_kind():
    try:
        return jax.devices()[0].device_kind.lower()
    except Exception:
        return ""


def _vmem_limit_bytes():
    k = _chip_kind()
    if "v7" in k or "7x" in k:
        return 56 * 1024 * 1024            # v7x: 64 MiB physical per TC
    if any(t in k for t in ("v4", "v5", "v6")):
        return 96 * 1024 * 1024            # 128 MiB physical VMEM
    return None                            # unknown: leave compiler default


def _softmax_dtype():
    k = _chip_kind()
    if "v6" in k or "v7" in k or "7x" in k:
        return jnp.bfloat16                # bf16 VPU/EUP path
    return jnp.float32                     # v5e / older: no bf16 VPU/EUP


# ---------------------------------------------------------------------------
# Kernel 1: fused shared projection + per-head attention scores.
# ---------------------------------------------------------------------------
def _proj_kernel(x_ref, w_ref, xs_ref, sc_ref, *, f_pad):
    big = jnp.dot(x_ref[...], w_ref[...], preferred_element_type=jnp.float32)
    xs_ref[...] = big[:, :f_pad].astype(xs_ref.dtype)   # projected features
    sc_ref[...] = big[:, f_pad:]                        # per-head scores (f32)


def _project(x_p, w_cat_bf16, *, f_pad, row_tile):
    ns_pad, f_in = x_p.shape
    tot = w_cat_bf16.shape[1]                           # f_pad + 128
    grid = (ns_pad // row_tile,)
    kernel = functools.partial(_proj_kernel, f_pad=f_pad)
    return pl.pallas_call(
        kernel,
        out_shape=(jax.ShapeDtypeStruct((ns_pad, f_pad), jnp.bfloat16),
                   jax.ShapeDtypeStruct((ns_pad, tot - f_pad), jnp.float32)),
        grid_spec=pltpu.PrefetchScalarGridSpec(
            num_scalar_prefetch=0,
            grid=grid,
            in_specs=[pl.BlockSpec((row_tile, f_in), lambda i: (i, 0)),
                      pl.BlockSpec((f_in, tot), lambda i: (0, 0))],
            out_specs=[pl.BlockSpec((row_tile, f_pad), lambda i: (i, 0)),
                       pl.BlockSpec((row_tile, tot - f_pad), lambda i: (i, 0))]),
        compiler_params=pltpu.CompilerParams(
            dimension_semantics=("parallel",),
            vmem_limit_bytes=_vmem_limit_bytes()),
    )(x_p, w_cat_bf16)


# ---------------------------------------------------------------------------
# Kernel 2: masked edge-softmax + aggregation (online softmax over Ns tiles).
# ---------------------------------------------------------------------------
def _gat_attn_kernel(adj_ref, asrc_ref, adst_ref, val_ref, b_ref, o_ref,
                     m_sc, l_sc, acc_sc, *, heads, f_out, hf, activation,
                     compute_dtype):
    j = pl.program_id(1)
    nd_t, f_pad = acc_sc.shape

    @pl.when(j == 0)
    def _():
        m_sc[...] = jnp.full_like(m_sc, _NEG_INF)
        l_sc[...] = jnp.zeros_like(l_sc)
        acc_sc[...] = jnp.zeros_like(acc_sc)

    # head owning each (lane-dense) output column; cols >= hf belong to no head
    col_head = jax.lax.broadcasted_iota(jnp.int32, (nd_t, f_pad), 1) // f_out

    edge = adj_ref[...] != 0                                   # [nd, ns] bool

    # Attention logits for ALL heads: e[h,i,s] = a_dst[h,i] + a_src[h,s]
    adst = adst_ref[...].astype(compute_dtype)                 # [H, nd]
    asrc = asrc_ref[...].astype(compute_dtype)                 # [H, ns]
    e = adst[:, :, None] + asrc[:, None, :]                    # [H, nd, ns]
    e = jnp.where(e > 0, e, jnp.asarray(0.2, compute_dtype) * e)   # LeakyReLU
    e = jnp.where(edge[None, :, :], e, jnp.asarray(_NEG_INF, compute_dtype))

    # Online softmax update.  No explicit "* edge" multiply: masked logits are
    # -1e30 so exp(e - m_new) underflows to exactly 0 once the row has >=1 edge;
    # rows that never see an edge are zeroed in the finalize (has_edge guard),
    # and any transient contamination is wiped by corr == 0 on the first edge.
    m_cur = jnp.max(e, axis=2).astype(jnp.float32)             # [H, nd]
    m_new = jnp.maximum(m_sc[...], m_cur)
    corr = jnp.exp(m_sc[...] - m_new)                          # [H, nd] f32
    p = jnp.exp(e - m_new.astype(compute_dtype)[:, :, None])   # [H, nd, ns]

    l_sc[...] = corr * l_sc[...] + jnp.sum(p.astype(jnp.float32), axis=2)

    # Aggregation: one full-width MXU matmul for all heads at once, then a
    # per-head column select keeps the accumulator lane-dense [nd, f_pad].
    ns_t = p.shape[2]
    p2 = p.reshape(heads * nd_t, ns_t).astype(val_ref.dtype)
    full = jnp.dot(p2, val_ref[...], preferred_element_type=jnp.float32)
    full = full.reshape(heads, nd_t, f_pad)                    # [H, nd, f_pad]

    corr3 = corr[:, :, None]                                   # [H, nd, 1]
    agg = jnp.zeros((nd_t, f_pad), jnp.float32)
    corr_cols = jnp.ones((nd_t, f_pad), jnp.float32)
    for h in range(heads):
        hm = col_head == h
        agg = jnp.where(hm, full[h], agg)
        corr_cols = jnp.where(hm, jnp.broadcast_to(corr3[h], (nd_t, f_pad)),
                              corr_cols)
    acc_sc[...] = corr_cols * acc_sc[...] + agg
    m_sc[...] = m_new

    @pl.when(j == pl.num_programs(1) - 1)
    def _():
        has_edge = (m_sc[...] > _NEG_INF * 0.5)[:, :, None]    # [H, nd, 1]
        l3 = l_sc[...][:, :, None]
        # exact reciprocal for the final normalisation (parity with reference)
        inv3 = jnp.where(has_edge, 1.0 / jnp.maximum(l3, 1e-30), 0.0)
        inv_cols = jnp.zeros((nd_t, f_pad), jnp.float32)
        for h in range(heads):
            inv_cols = jnp.where(col_head == h,
                                 jnp.broadcast_to(inv3[h], (nd_t, f_pad)),
                                 inv_cols)
        out = acc_sc[...] * inv_cols + b_ref[...]              # lane-dense
        if activation == "elu":
            out = jnp.where(out > 0, out, jnp.exp(jnp.minimum(out, 0.0)) - 1.0)
        elif activation == "log_softmax":
            col = jax.lax.broadcasted_iota(jnp.int32, out.shape, 1)
            valid = col < hf
            z = jnp.where(valid, out, _NEG_INF)
            z = z - jnp.max(z, axis=1, keepdims=True)
            ez = jnp.where(valid, jnp.exp(z), 0.0)
            lse = jnp.log(jnp.sum(ez, axis=1, keepdims=True))
            out = jnp.where(valid, z - lse, 0.0)
        o_ref[...] = out.astype(o_ref.dtype)


def _attention(adj_p, a_src_t, a_dst_t, vals, b_p, *, heads, f_out, hf, f_pad,
               activation, nd_tile, ns_tile, compute_dtype):
    nd_pad, ns_pad = adj_p.shape
    grid = (nd_pad // nd_tile, ns_pad // ns_tile)
    kernel = functools.partial(_gat_attn_kernel, heads=heads, f_out=f_out,
                               hf=hf, activation=activation,
                               compute_dtype=compute_dtype)
    return pl.pallas_call(
        kernel,
        out_shape=jax.ShapeDtypeStruct((nd_pad, f_pad), jnp.float32),
        grid_spec=pltpu.PrefetchScalarGridSpec(
            num_scalar_prefetch=0,
            grid=grid,
            in_specs=[
                pl.BlockSpec((nd_tile, ns_tile), lambda i, j: (i, j)),   # adj int8
                pl.BlockSpec((heads, ns_tile), lambda i, j: (0, j)),     # a_src^T
                pl.BlockSpec((heads, nd_tile), lambda i, j: (0, i)),     # a_dst^T
                pl.BlockSpec((ns_tile, f_pad), lambda i, j: (j, 0)),     # values (lane-dense)
                pl.BlockSpec((1, f_pad), lambda i, j: (0, 0)),           # bias
            ],
            out_specs=pl.BlockSpec((nd_tile, f_pad), lambda i, j: (i, 0)),
            scratch_shapes=[pltpu.VMEM((heads, nd_tile), jnp.float32),   # m
                            pltpu.VMEM((heads, nd_tile), jnp.float32),   # l
                            pltpu.VMEM((nd_tile, f_pad), jnp.float32)]), # acc (lane-dense)
        compiler_params=pltpu.CompilerParams(
            dimension_semantics=("parallel", "arbitrary"),
            vmem_limit_bytes=_vmem_limit_bytes()),
    )(adj_p, a_src_t, a_dst_t, vals, b_p)


# ---------------------------------------------------------------------------
# One GATConv layer (wrapper: padding, parameter packing, tiny glue).
# ---------------------------------------------------------------------------
def _pick_nd_tile(n_dst, pref):
    nd_pad = _round_up(n_dst, _LANE)
    t = min(pref, nd_pad)
    k = _chip_kind()
    # v7x has 2 TensorCores: keep the "parallel" Nd axis at >= 2 tiles when the
    # block allows it so both cores are busy.
    if ("v7" in k or "7x" in k) and nd_pad // t < 2 and nd_pad >= 2 * _LANE:
        t = _round_up(nd_pad // 2, _LANE)
    return t


def gat_conv(x, res_n_id, adj, w, att_src, att_dst, bias, *, heads, f_out,
             activation, nd_tile_pref=256, ns_tile_pref=256):
    n_src, f_in = x.shape
    n_dst = adj.shape[0]
    hf = heads * f_out
    f_pad = _round_up(hf, _LANE)

    ns_tile = min(ns_tile_pref, _round_up(n_src, _LANE))
    ns_pad = _round_up(n_src, ns_tile)
    nd_tile = _pick_nd_tile(n_dst, nd_tile_pref)
    nd_pad = _round_up(n_dst, nd_tile)

    # ---- parameter packing (lane-dense, zero-padded) ----
    # att_src / att_dst are folded into the projection: w_att = W @ att2, so the
    # projection kernel is a single x @ [W | w_att] pass of width f_pad + 128.
    w_p = jnp.zeros((f_in, f_pad), jnp.float32).at[:w.shape[0], :hf].set(w)
    att2 = jnp.zeros((hf, 2 * heads), jnp.float32)
    for h in range(heads):
        att2 = att2.at[h * f_out:(h + 1) * f_out, h].set(att_src[h])
        att2 = att2.at[h * f_out:(h + 1) * f_out, heads + h].set(att_dst[h])
    w_att = jnp.zeros((f_in, _LANE), jnp.float32).at[
        :w.shape[0], :2 * heads].set(w @ att2)
    w_cat = jnp.concatenate([w_p, w_att], axis=1).astype(jnp.bfloat16)
    b_p = jnp.zeros((1, f_pad), jnp.float32).at[0, :hf].set(bias.reshape(-1))

    x_p = jnp.zeros((ns_pad, f_in), jnp.bfloat16).at[:n_src].set(
        x.astype(jnp.bfloat16))

    # ---- kernel 1: fused shared projection + attention-score matmul ----
    row_tile = ns_tile
    for cand in (2048, 1024, 512, 256, 128):
        if cand <= ns_pad and ns_pad % cand == 0:
            row_tile = cand
            break
    xs_proj, scores = _project(x_p, w_cat, f_pad=f_pad, row_tile=row_tile)
    # xs_proj: [ns_pad, f_pad] bf16 -> fed straight to kernel 2 as the value slab
    # scores : [ns_pad, 128] f32, cols 0..H-1 = alpha_src, H..2H-1 = alpha_dst

    # ---- tiny glue (plain JAX): transposed score rows + dst gather ----
    a_src_t = scores[:, :heads].T                                  # [H, ns_pad]
    a_dst = jnp.take(scores[:, heads:2 * heads], res_n_id, axis=0).T
    a_dst_t = jnp.zeros((heads, nd_pad), jnp.float32).at[:, :n_dst].set(a_dst)

    adj_p = jnp.zeros((nd_pad, ns_pad), jnp.int8).at[:n_dst, :n_src].set(adj)

    # ---- kernel 2: masked edge-softmax + aggregation ----
    out = _attention(adj_p, a_src_t, a_dst_t, xs_proj, b_p, heads=heads,
                     f_out=f_out, hf=hf, f_pad=f_pad, activation=activation,
                     nd_tile=nd_tile, ns_tile=ns_tile,
                     compute_dtype=_softmax_dtype())
    return out[:n_dst]              # [n_dst, f_pad]; cols >= heads*f_out are 0


def _dense_adj(edge_index, n_src, n_dst):
    """Dense int8 adjacency adj[dst, src]; adds self-loops to match PyG
    GATConv's add_self_loops=True.
    TODO(synk): if a sampled block ever had n_dst > n_src this self-loop
    handling would diverge from PyG (here dst nodes are always a src subset)."""
    src, dst = edge_index[0], edge_index[1]
    adj = jnp.zeros((n_dst, n_src), jnp.int8).at[dst, src].set(1)
    d = jnp.arange(min(n_src, n_dst), dtype=jnp.int32)
    return adj.at[d, d].set(1)


class GATNetPallas:
    """2-layer GAT (conv1: 8 heads x 8, conv2: 1 head x out_channels),
    deterministically initialized with shapes matching PyG's GATConv."""

    def __init__(self, in_channels, out_channels, key):
        ks = jax.random.split(key, 8)
        h1, f1 = 8, 8
        self.w1 = jax.random.normal(ks[0], (in_channels, h1 * f1), jnp.float32) * 0.1
        self.att_src1 = jax.random.normal(ks[1], (h1, f1), jnp.float32) * 0.1
        self.att_dst1 = jax.random.normal(ks[2], (h1, f1), jnp.float32) * 0.1
        self.b1 = jax.random.normal(ks[3], (h1 * f1,), jnp.float32) * 0.01
        self.h1, self.f1 = h1, f1
        h2, f2 = 1, out_channels
        self.w2 = jax.random.normal(ks[4], (h1 * f1, h2 * f2), jnp.float32) * 0.1
        self.att_src2 = jax.random.normal(ks[5], (h2, f2), jnp.float32) * 0.1
        self.att_dst2 = jax.random.normal(ks[6], (h2, f2), jnp.float32) * 0.1
        self.b2 = jax.random.normal(ks[7], (h2 * f2,), jnp.float32) * 0.01
        self.h2, self.f2 = h2, f2

    def forward(self, x, data_flow):
        # ----- block 0 : conv1 + ELU (F.dropout is identity at inference) -----
        n_id0, res_n_id0, edge_index0, size0 = data_flow[0]
        x0 = jnp.take(x, n_id0, axis=0)                      # glue: x[block.n_id]
        adj0 = _dense_adj(edge_index0, size0[0], size0[1])
        x1 = gat_conv(x0, res_n_id0, adj0, self.w1, self.att_src1,
                      self.att_dst1, self.b1, heads=self.h1, f_out=self.f1,
                      activation="elu")                      # [n1, 128], cols>=64 are 0
        # ----- block 1 : conv2 + log_softmax -----
        _, res_n_id1, edge_index1, size1 = data_flow[1]
        adj1 = _dense_adj(edge_index1, size1[0], size1[1])
        out = gat_conv(x1, res_n_id1, adj1, self.w2, self.att_src2,
                       self.att_dst2, self.b2, heads=self.h2, f_out=self.f2,
                       activation="log_softmax")
        return out[:, :self.h2 * self.f2]


if __name__ == "__main__":
    key = jax.random.PRNGKey(0)
    k_x, k_e0, k_e1, k_p = jax.random.split(key, 4)

    in_channels, out_channels = 64, 16
    n_total, n0, n1, n2 = 512, 384, 256, 128       # multi-tile grids
    deg = 8

    x = jax.random.normal(k_x, (n_total, in_channels), jnp.float32)

    # synthetic data_flow (two sampled blocks); every dst node gets `deg` in-edges.
    n_id0 = jnp.arange(n0, dtype=jnp.int32)
    res_n_id0 = jnp.arange(n1, dtype=jnp.int32)
    src0 = jax.random.randint(k_e0, (deg * n1,), 0, n0, dtype=jnp.int32)
    dst0 = jnp.tile(jnp.arange(n1, dtype=jnp.int32), deg)
    edge_index0 = jnp.stack([src0, dst0])
    block0 = (n_id0, res_n_id0, edge_index0, (n0, n1))

    res_n_id1 = jnp.arange(n2, dtype=jnp.int32)
    src1 = jax.random.randint(k_e1, (deg * n2,), 0, n1, dtype=jnp.int32)
    dst1 = jnp.tile(jnp.arange(n2, dtype=jnp.int32), deg)
    edge_index1 = jnp.stack([src1, dst1])
    block1 = (None, res_n_id1, edge_index1, (n1, n2))

    model = GATNetPallas(in_channels, out_channels, k_p)
    out = model.forward(x, [block0, block1])
    out = jax.block_until_ready(out)

    assert out.shape == (n2, out_channels)
    assert bool(jnp.all(jnp.isfinite(out)))
    # log_softmax rows should sum to ~1 in probability space
    rowsum = jnp.sum(jnp.exp(out), axis=1)
    assert bool(jnp.all(jnp.abs(rowsum - 1.0) < 1e-3))
    print("KERNEL_OK")
</pallas_src>

<mosaic_0001>
module attributes {stable_mosaic.version = 11 : i64} {
  func.func @_proj_kernel(%arg0: i32, %arg1: memref<512x64xbf16, #tpu.memory_space<vmem>>, %arg2: memref<64x256xbf16, #tpu.memory_space<vmem>>, %arg3: memref<512x128xbf16, #tpu.memory_space<vmem>>, %arg4: memref<512x128xf32, #tpu.memory_space<vmem>>) attributes {dimension_semantics = [#tpu.dimension_semantics<parallel>], iteration_bounds = array<i64: 1>, scalar_prefetch = 0 : i64, scratch_operands = 0 : i64, tpu.core_type = #tpu.core_type<tc>, window_params = [{transform_indices = @transform_0, window_bounds = array<i64: 512, 64>}, {pipeline_mode = #tpu.pipeline_mode<synchronous>, transform_indices = @transform_1, window_bounds = array<i64: 64, 256>}, {transform_indices = @transform_2, window_bounds = array<i64: 512, 128>}, {transform_indices = @transform_3, window_bounds = array<i64: 512, 128>}]} {
    %c0 = arith.constant 0 : index
    %c0_0 = arith.constant 0 : index
    %0 = vector.load %arg1[%c0, %c0_0] : memref<512x64xbf16, #tpu.memory_space<vmem>>, vector<512x64xbf16>
    %c0_1 = arith.constant 0 : index
    %c0_2 = arith.constant 0 : index
    %1 = vector.load %arg2[%c0_1, %c0_2] : memref<64x256xbf16, #tpu.memory_space<vmem>>, vector<64x256xbf16>
    %cst = arith.constant dense<0.000000e+00> : vector<512x256xf32>
    %2 = tpu.matmul %0, %1, %cst {dimension_numbers = #tpu.dot_dimension_numbers<[1], [0], [0], [1], [0, 0, 1, 1], [], []>} : vector<512x64xbf16>, vector<64x256xbf16>, vector<512x256xf32> -> vector<512x256xf32>
    %3 = vector.extract_strided_slice %2 {offsets = [0, 0], sizes = [512, 128], strides = [1, 1]} : vector<512x256xf32> to vector<512x128xf32>
    %4 = arith.truncf %3 : vector<512x128xf32> to vector<512x128xbf16>
    %c0_3 = arith.constant 0 : index
    %c0_4 = arith.constant 0 : index
    %5 = vector.load %arg3[%c0_3, %c0_4] : memref<512x128xbf16, #tpu.memory_space<vmem>>, vector<512x128xbf16>
    tpu.vector_store %arg3[%c0_3, %c0_4], %4 {strides = array<i32>} : memref<512x128xbf16, #tpu.memory_space<vmem>>, vector<512x128xbf16>,
    %6 = vector.extract_strided_slice %2 {offsets = [0, 128], sizes = [512, 128], strides = [1, 1]} : vector<512x256xf32> to vector<512x128xf32>
    %c0_5 = arith.constant 0 : index
    %c0_6 = arith.constant 0 : index
    %7 = vector.load %arg4[%c0_5, %c0_6] : memref<512x128xf32, #tpu.memory_space<vmem>>, vector<512x128xf32>
    tpu.vector_store %arg4[%c0_5, %c0_6], %6 {strides = array<i32>} : memref<512x128xf32, #tpu.memory_space<vmem>>, vector<512x128xf32>,
    return
  }
  func.func @transform_0(%arg0: i32) -> (i32, i32) {
    %c0_i32 = arith.constant 0 : i32
    %c0_i32_0 = arith.constant 0 : i32
    return %arg0, %c0_i32 : i32, i32
  }
  func.func @transform_1(%arg0: i32) -> (i32, i32) {
    %c0_i32 = arith.constant 0 : i32
    %c0_i32_0 = arith.constant 0 : i32
    %c0_i32_1 = arith.constant 0 : i32
    return %c0_i32, %c0_i32_0 : i32, i32
  }
  func.func @transform_2(%arg0: i32) -> (i32, i32) {
    %c0_i32 = arith.constant 0 : i32
    %c0_i32_0 = arith.constant 0 : i32
    return %arg0, %c0_i32 : i32, i32
  }
  func.func @transform_3(%arg0: i32) -> (i32, i32) {
    %c0_i32 = arith.constant 0 : i32
    %c0_i32_0 = arith.constant 0 : i32
    return %arg0, %c0_i32 : i32, i32
  }
}

</mosaic_0001>

<llo_original>
// kernel: tpu_custom_call.1
$region0: #{tpu_custom_call.1}
  #allocation0 [shape = 'u32[]', space=smem, size = 0x4, offset = 0x4, fixed_abs, tag = 'smem constant byte address 0x4 - core index']
  #allocation1 [shape = 'u32[72,128]{1,0:T(1,128)}', space=vmem, size = 0x9000, scoped, tag = 'internal scratch']
  %s0 = inlined_call_operand.vmem [shape: bf16[512,64], index: 0, kind: input, shape index: {}]
  %s1 = inlined_call_operand.vmem [shape: bf16[64,256], index: 1, kind: input, shape index: {}]
  %s2 = inlined_call_operand.hbm [shape: bf16[512,128], index: 2, kind: output, shape index: {0}]
  %s3 = inlined_call_operand.hbm [shape: f32[512,128], index: 3, kind: output, shape index: {1}]
  %4 = xla_tuple %s2, %s3
  %s5 = sld [smem:[#allocation0]]
  $region26: #{tpu_custom_call.1} parent=0
    _
  %s7 = ssub.s32 1, %s5
  %s8 = scalar_select 0, %s7, %s5
  $region1: #{tpu_custom_call.1} parent=0
    #allocation2 [shape = 'u8[131072]{0}', space=vmem, size = 0x20000, scoped, tag = 'output window, operand 0, single buffered']
    #allocation3 [shape = 's32[1]{0}', space=sflag, size = 0x4, scoped, tag = 'scoped memory for tpu_custom_call.1']
    #allocation4 [shape = 'u8[262144]{0}', space=vmem, size = 0x40000, scoped, tag = 'output window, operand 1, single buffered']
    #allocation5 [shape = 's32[1]{0}', space=sflag, size = 0x4, scoped, tag = 'scoped memory for tpu_custom_call.1']
    %9 = vsyncpa [#allocation3], 0
    %10 = vsyncpa [#allocation5], 0
    // Predicated region
    $region2: #{tpu_custom_call.1} parent=1 // pred_check
      _
    $region3: #{tpu_custom_call.1} parent=1 // pred_check_branch
      %12 = sbr.rel (0) target = $region5
    $region4: #{tpu_custom_call.1} parent=1 // pred_region
      _
    $region5: #{tpu_custom_call.1} parent=1 // pred_fallthru
      _
    // Predicated region
    $region6: #{tpu_custom_call.1} parent=1 // pred_check
      _
    $region7: #{tpu_custom_call.1} parent=1 // pred_check_branch
      %14 = sbr.rel (0) target = $region9
    $region8: #{tpu_custom_call.1} parent=1 // pred_region
      _
    $region9: #{tpu_custom_call.1} parent=1 // pred_fallthru
      _
    %v16 = vld [vmem:[%s0] sm:$0xf]
    %v17 = vld [vmem:[%s0 + $0x4] sm:$0xf]
    %v18 = vld [vmem:[%s0 + $0x8] sm:$0xf]
    %v19 = vld [vmem:[%s0 + $0xc] sm:$0xf]
    %v20 = vld [vmem:[%s0 + $0x10] sm:$0xf]
    %v21 = vld [vmem:[%s0 + $0x14] sm:$0xf]
    %v22 = vld [vmem:[%s0 + $0x18] sm:$0xf]
    %v23 = vld [vmem:[%s0 + $0x1c] sm:$0xf]
    %v24 = vld [vmem:[%s0 + $0x20] sm:$0xf]
    %v25 = vld [vmem:[%s0 + $0x24] sm:$0xf]
    %v26 = vld [vmem:[%s0 + $0x28] sm:$0xf]
    %v27 = vld [vmem:[%s0 + $0x2c] sm:$0xf]
    %v28 = vld [vmem:[%s0 + $0x30] sm:$0xf]
    %v29 = vld [vmem:[%s0 + $0x34] sm:$0xf]
    %v30 = vld [vmem:[%s0 + $0x38] sm:$0xf]
    %v31 = vld [vmem:[%s0 + $0x3c] sm:$0xf]
    %v32 = vld [vmem:[%s0 + $0x40] sm:$0xf]
    %v33 = vld [vmem:[%s0 + $0x44] sm:$0xf]
    %v34 = vld [vmem:[%s0 + $0x48] sm:$0xf]
    %v35 = vld [vmem:[%s0 + $0x4c] sm:$0xf]
    %v36 = vld [vmem:[%s0 + $0x50] sm:$0xf]
    %v37 = vld [vmem:[%s0 + $0x54] sm:$0xf]
    %v38 = vld [vmem:[%s0 + $0x58] sm:$0xf]
    %v39 = vld [vmem:[%s0 + $0x5c] sm:$0xf]
    %v40 = vld [vmem:[%s0 + $0x60] sm:$0xf]
    %v41 = vld [vmem:[%s0 + $0x64] sm:$0xf]
    %v42 = vld [vmem:[%s0 + $0x68] sm:$0xf]
    %v43 = vld [vmem:[%s0 + $0x6c] sm:$0xf]
    %v44 = vld [vmem:[%s0 + $0x70] sm:$0xf]
    %v45 = vld [vmem:[%s0 + $0x74] sm:$0xf]
    %v46 = vld [vmem:[%s0 + $0x78] sm:$0xf]
    %v47 = vld [vmem:[%s0 + $0x7c] sm:$0xf]
    %v48 = vld [vmem:[%s0 + $0x80] sm:$0xf]
    %v49 = vld [vmem:[%s0 + $0x84] sm:$0xf]
    %v50 = vld [vmem:[%s0 + $0x88] sm:$0xf]
    %v51 = vld [vmem:[%s0 + $0x8c] sm:$0xf]
    %v52 = vld [vmem:[%s0 + $0x90] sm:$0xf]
    %v53 = vld [vmem:[%s0 + $0x94] sm:$0xf]
    %v54 = vld [vmem:[%s0 + $0x98] sm:$0xf]
    %v55 = vld [vmem:[%s0 + $0x9c] sm:$0xf]
    %v56 = vld [vmem:[%s0 + $0xa0] sm:$0xf]
    %v57 = vld [vmem:[%s0 + $0xa4] sm:$0xf]
    %v58 = vld [vmem:[%s0 + $0xa8] sm:$0xf]
    %v59 = vld [vmem:[%s0 + $0xac] sm:$0xf]
    %v60 = vld [vmem:[%s0 + $0xb0] sm:$0xf]
    %v61 = vld [vmem:[%s0 + $0xb4] sm:$0xf]
    %v62 = vld [vmem:[%s0 + $0xb8] sm:$0xf]
    %v63 = vld [vmem:[%s0 + $0xbc] sm:$0xf]
    %v64 = vld [vmem:[%s0 + $0xc0] sm:$0xf]
    %v65 = vld [vmem:[%s0 + $0xc4] sm:$0xf]
    %v66 = vld [vmem:[%s0 + $0xc8] sm:$0xf]
    %v67 = vld [vmem:[%s0 + $0xcc] sm:$0xf]
    %v68 = vld [vmem:[%s0 + $0xd0] sm:$0xf]
    %v69 = vld [vmem:[%s0 + $0xd4] sm:$0xf]
    %v70 = vld [vmem:[%s0 + $0xd8] sm:$0xf]
    %v71 = vld [vmem:[%s0 + $0xdc] sm:$0xf]
    %v72 = vld [vmem:[%s0 + $0xe0] sm:$0xf]
    %v73 = vld [vmem:[%s0 + $0xe4] sm:$0xf]
    %v74 = vld [vmem:[%s0 + $0xe8] sm:$0xf]
    %v75 = vld [vmem:[%s0 + $0xec] sm:$0xf]
    %v76 = vld [vmem:[%s0 + $0xf0] sm:$0xf]
    %v77 = vld [vmem:[%s0 + $0xf4] sm:$0xf]
    %v78 = vld [vmem:[%s0 + $0xf8] sm:$0xf]
    %v79 = vld [vmem:[%s0 + $0xfc] sm:$0xf]
    %v80 = vld [vmem:[%s1] sm:$0xff]
    %v81 = vld [vmem:[%s1 + $0x8] sm:$0xff]
    %v82 = vld [vmem:[%s1 + $0x10] sm:$0xff]
    %v83 = vld [vmem:[%s1 + $0x18] sm:$0xff]
    %v84 = vld [vmem:[%s1 + $0x20] sm:$0xff]
    %v85 = vld [vmem:[%s1 + $0x28] sm:$0xff]
    %v86 = vld [vmem:[%s1 + $0x30] sm:$0xff]
    %v87 = vld [vmem:[%s1 + $0x38] sm:$0xff]
    %v152 = vunpack.c.l.b16 %v16
    %v153 = vunpack.c.l.b16 %v17
    %v154 = vunpack.c.l.b16 %v18
    %v155 = vunpack.c.l.b16 %v19
    %v156 = vunpack.c.l.b16 %v20
    %v157 = vunpack.c.l.b16 %v21
    %v158 = vunpack.c.l.b16 %v22
    %v159 = vunpack.c.l.b16 %v23
    %v160 = vunpack.c.l.b16 %v24
    %v161 = vunpack.c.l.b16 %v25
    %v162 = vunpack.c.l.b16 %v26
    %v163 = vunpack.c.l.b16 %v27
    %v164 = vunpack.c.l.b16 %v28
    %v165 = vunpack.c.l.b16 %v29
    %v166 = vunpack.c.l.b16 %v30
    %v167 = vunpack.c.l.b16 %v31
    %v168 = vunpack.c.l.b16 %v32
    %v169 = vunpack.c.l.b16 %v33
    %v170 = vunpack.c.l.b16 %v34
    %v171 = vunpack.c.l.b16 %v35
    %v172 = vunpack.c.l.b16 %v36
    %v173 = vunpack.c.l.b16 %v37
    %v174 = vunpack.c.l.b16 %v38
    %v175 = vunpack.c.l.b16 %v39
    %v176 = vunpack.c.l.b16 %v40
    %v177 = vunpack.c.l.b16 %v41
    %v178 = vunpack.c.l.b16 %v42
    %v179 = vunpack.c.l.b16 %v43
    %v180 = vunpack.c.l.b16 %v44
    %v181 = vunpack.c.l.b16 %v45
    %v182 = vunpack.c.l.b16 %v46
    %v183 = vunpack.c.l.b16 %v47
    %v184 = vunpack.c.l.b16 %v48
    %v185 = vunpack.c.l.b16 %v49
    %v186 = vunpack.c.l.b16 %v50
    %v187 = vunpack.c.l.b16 %v51
    %v188 = vunpack.c.l.b16 %v52
    %v189 = vunpack.c.l.b16 %v53
    %v190 = vunpack.c.l.b16 %v54
    %v191 = vunpack.c.l.b16 %v55
    %v192 = vunpack.c.l.b16 %v56
    %v193 = vunpack.c.l.b16 %v57
    %v194 = vunpack.c.l.b16 %v58
    %v195 = vunpack.c.l.b16 %v59
    %v196 = vunpack.c.l.b16 %v60
    %v197 = vunpack.c.l.b16 %v61
    %v198 = vunpack.c.l.b16 %v62
    %v199 = vunpack.c.l.b16 %v63
    %v200 = vunpack.c.l.b16 %v64
    %v201 = vunpack.c.l.b16 %v65
    %v202 = vunpack.c.l.b16 %v66
    %v203 = vunpack.c.l.b16 %v67
    %v204 = vunpack.c.l.b16 %v68
    %v205 = vunpack.c.l.b16 %v69
    %v206 = vunpack.c.l.b16 %v70
    %v207 = vunpack.c.l.b16 %v71
    %v208 = vunpack.c.l.b16 %v72
    %v209 = vunpack.c.l.b16 %v73
    %v210 = vunpack.c.l.b16 %v74
    %v211 = vunpack.c.l.b16 %v75
    %v212 = vunpack.c.l.b16 %v76
    %v213 = vunpack.c.l.b16 %v77
    %v214 = vunpack.c.l.b16 %v78
    %v215 = vunpack.c.l.b16 %v79
    %v216 = vpack.c.b16 %v153, %v152
    %v217 = vpack.c.b16 %v155, %v154
    %v218 = vpack.c.b16 %v157, %v156
    %v219 = vpack.c.b16 %v159, %v158
    %v220 = vpack.c.b16 %v161, %v160
    %v221 = vpack.c.b16 %v163, %v162
    %v222 = vpack.c.b16 %v165, %v164
    %v223 = vpack.c.b16 %v167, %v166
    %v224 = vpack.c.b16 %v169, %v168
    %v225 = vpack.c.b16 %v171, %v170
    %v226 = vpack.c.b16 %v173, %v172
    %v227 = vpack.c.b16 %v175, %v174
    %v228 = vpack.c.b16 %v177, %v176
    %v229 = vpack.c.b16 %v179, %v178
    %v230 = vpack.c.b16 %v181, %v180
    %v231 = vpack.c.b16 %v183, %v182
    %v232 = vpack.c.b16 %v185, %v184
    %v233 = vpack.c.b16 %v187, %v186
    %v234 = vpack.c.b16 %v189, %v188
    %v235 = vpack.c.b16 %v191, %v190
    %v236 = vpack.c.b16 %v193, %v192
    %v237 = vpack.c.b16 %v195, %v194
    %v238 = vpack.c.b16 %v197, %v196
    %v239 = vpack.c.b16 %v199, %v198
    %v240 = vpack.c.b16 %v201, %v200
    %v241 = vpack.c.b16 %v203, %v202
    %v242 = vpack.c.b16 %v205, %v204
    %v243 = vpack.c.b16 %v207, %v206
    %v244 = vpack.c.b16 %v209, %v208
    %v245 = vpack.c.b16 %v211, %v210
    %v246 = vpack.c.b16 %v213, %v212
    %v247 = vpack.c.b16 %v215, %v214
    %v256 = vunpack.c.l.b16 %v80
    %v257 = vunpack.c.h.b16 %v80
    %v258 = vunpack.c.l.b16 %v81
    %v259 = vunpack.c.h.b16 %v81
    %v260 = vunpack.c.l.b16 %v82
    %v261 = vunpack.c.h.b16 %v82
    %v262 = vunpack.c.l.b16 %v83
    %v263 = vunpack.c.h.b16 %v83
    %v264 = vunpack.c.l.b16 %v84
    %v265 = vunpack.c.h.b16 %v84
    %v266 = vunpack.c.l.b16 %v85
    %v267 = vunpack.c.h.b16 %v85
    %v268 = vunpack.c.l.b16 %v86
    %v269 = vunpack.c.h.b16 %v86
    %v270 = vunpack.c.l.b16 %v87
    %v271 = vunpack.c.h.b16 %v87
    %v272 = vpack.c.b16 %v258, %v256
    %v273 = vpack.c.b16 %v259, %v257
    %v274 = vpack.c.b16 %v262, %v260
    %v275 = vpack.c.b16 %v263, %v261
    %v276 = vpack.c.b16 %v266, %v264
    %v277 = vpack.c.b16 %v267, %v265
    %v278 = vpack.c.b16 %v270, %v268
    %v279 = vpack.c.b16 %v271, %v269
    %vm288 = vcmask 523264
    %v290 = vsel %vm288, %v216, 0
    %v293 = vsel %vm288, %v217, 0
    %v296 = vsel %vm288, %v218, 0
    %v299 = vsel %vm288, %v219, 0
    %v302 = vsel %vm288, %v220, 0
    %v305 = vsel %vm288, %v221, 0
    %v308 = vsel %vm288, %v222, 0
    %v311 = vsel %vm288, %v223, 0
    %v314 = vsel %vm288, %v224, 0
    %v317 = vsel %vm288, %v225, 0
    %v320 = vsel %vm288, %v226, 0
    %v323 = vsel %vm288, %v227, 0
    %v326 = vsel %vm288, %v228, 0
    %v329 = vsel %vm288, %v229, 0
    %v332 = vsel %vm288, %v230, 0
    %v335 = vsel %vm288, %v231, 0
    %v338 = vsel %vm288, %v232, 0
    %v341 = vsel %vm288, %v233, 0
    %v344 = vsel %vm288, %v234, 0
    %v347 = vsel %vm288, %v235, 0
    %v350 = vsel %vm288, %v236, 0
    %v353 = vsel %vm288, %v237, 0
    %v356 = vsel %vm288, %v238, 0
    %v359 = vsel %vm288, %v239, 0
    %v362 = vsel %vm288, %v240, 0
    %v365 = vsel %vm288, %v241, 0
    %v368 = vsel %vm288, %v242, 0
    %v371 = vsel %vm288, %v243, 0
    %v374 = vsel %vm288, %v244, 0
    %v377 = vsel %vm288, %v245, 0
    %v380 = vsel %vm288, %v246, 0
    %v383 = vsel %vm288, %v247, 0
    %385 = vmatpush.bf16.msra.mxu0 0
    %386 = vmatpush.bf16.msra.mxu0 0
    %387 = vmatpush.bf16.msra.mxu0 0
    %388 = vmatpush.bf16.msra.mxu0 0
    %389 = vmatpush.bf16.msra.mxu0 %v278
    %390 = vmatpush.bf16.msra.mxu0 %v276
    %391 = vmatpush.bf16.msra.mxu0 %v274
    %392 = vmatpush.bf16.msra.mxu0 %v272
    %393 = vmatmul.bf16.gmra.mxu0 %v290
    %v394 = vpop.f32.mrf.mxu0
    %v395 = vadd.f32 0.0, %v394
    %v396 = vpop.f32.mrf.mxu0
    %v397 = vadd.f32 0.0, %v396
    %398 = vmatmul.bf16.gmra.mxu0 %v293
    %v399 = vpop.f32.mrf.mxu0
    %v400 = vadd.f32 0.0, %v399
    %v401 = vpop.f32.mrf.mxu0
    %v402 = vadd.f32 0.0, %v401
    %403 = vmatmul.bf16.gmra.mxu0 %v296
    %v404 = vpop.f32.mrf.mxu0
    %v405 = vadd.f32 0.0, %v404
    %v406 = vpop.f32.mrf.mxu0
    %v407 = vadd.f32 0.0, %v406
    %408 = vmatmul.bf16.gmra.mxu0 %v299
    %v409 = vpop.f32.mrf.mxu0
    %v410 = vadd.f32 0.0, %v409
    %v411 = vpop.f32.mrf.mxu0
    %v412 = vadd.f32 0.0, %v411
    %413 = vmatmul.bf16.gmra.mxu0 %v302
    %v414 = vpop.f32.mrf.mxu0
    %v415 = vadd.f32 0.0, %v414
    %v416 = vpop.f32.mrf.mxu0
    %v417 = vadd.f32 0.0, %v416
    %418 = vmatmul.bf16.gmra.mxu0 %v305
    %v419 = vpop.f32.mrf.mxu0
    %v420 = vadd.f32 0.0, %v419
    %v421 = vpop.f32.mrf.mxu0
    %v422 = vadd.f32 0.0, %v421
    %423 = vmatmul.bf16.gmra.mxu0 %v308
    %v424 = vpop.f32.mrf.mxu0
    %v425 = vadd.f32 0.0, %v424
    %v426 = vpop.f32.mrf.mxu0
    %v427 = vadd.f32 0.0, %v426
    %428 = vmatmul.bf16.gmra.mxu0 %v311
    %v429 = vpop.f32.mrf.mxu0
    %v430 = vadd.f32 0.0, %v429
    %v431 = vpop.f32.mrf.mxu0
    %v432 = vadd.f32 0.0, %v431
    %433 = vmatmul.bf16.gmra.mxu0 %v314
    %v434 = vpop.f32.mrf.mxu0
    %v435 = vadd.f32 0.0, %v434
    %v436 = vpop.f32.mrf.mxu0
    %v437 = vadd.f32 0.0, %v436
    %438 = vmatmul.bf16.gmra.mxu0 %v317
    %v439 = vpop.f32.mrf.mxu0
    %v440 = vadd.f32 0.0, %v439
    %v441 = vpop.f32.mrf.mxu0
    %v442 = vadd.f32 0.0, %v441
    %443 = vmatmul.bf16.gmra.mxu0 %v320
    %v444 = vpop.f32.mrf.mxu0
    %v445 = vadd.f32 0.0, %v444
    %v446 = vpop.f32.mrf.mxu0
    %v447 = vadd.f32 0.0, %v446
    %448 = vmatmul.bf16.gmra.mxu0 %v323
    %v449 = vpop.f32.mrf.mxu0
    %v450 = vadd.f32 0.0, %v449
    %v451 = vpop.f32.mrf.mxu0
    %v452 = vadd.f32 0.0, %v451
    %453 = vmatmul.bf16.gmra.mxu0 %v326
    %v454 = vpop.f32.mrf.mxu0
    %v455 = vadd.f32 0.0, %v454
    %v456 = vpop.f32.mrf.mxu0
    %v457 = vadd.f32 0.0, %v456
    %458 = vmatmul.bf16.gmra.mxu0 %v329
    %v459 = vpop.f32.mrf.mxu0
    %v460 = vadd.f32 0.0, %v459
    %v461 = vpop.f32.mrf.mxu0
    %v462 = vadd.f32 0.0, %v461
    %463 = vmatmul.bf16.gmra.mxu0 %v332
    %v464 = vpop.f32.mrf.mxu0
    %v465 = vadd.f32 0.0, %v464
    %v466 = vpop.f32.mrf.mxu0
    %v467 = vadd.f32 0.0, %v466
    %468 = vmatmul.bf16.gmra.mxu0 %v335
    %v469 = vpop.f32.mrf.mxu0
    %v470 = vadd.f32 0.0, %v469
    %v471 = vpop.f32.mrf.mxu0
    %v472 = vadd.f32 0.0, %v471
    %473 = vmatmul.bf16.gmra.mxu0 %v338
    %v474 = vpop.f32.mrf.mxu0
    %v475 = vadd.f32 0.0, %v474
    %v476 = vpop.f32.mrf.mxu0
    %v477 = vadd.f32 0.0, %v476
    %478 = vmatmul.bf16.gmra.mxu0 %v341
    %v479 = vpop.f32.mrf.mxu0
    %v480 = vadd.f32 0.0, %v479
    %v481 = vpop.f32.mrf.mxu0
    %v482 = vadd.f32 0.0, %v481
    %483 = vmatmul.bf16.gmra.mxu0 %v344
    %v484 = vpop.f32.mrf.mxu0
    %v485 = vadd.f32 0.0, %v484
    %v486 = vpop.f32.mrf.mxu0
    %v487 = vadd.f32 0.0, %v486
    %488 = vmatmul.bf16.gmra.mxu0 %v347
    %v489 = vpop.f32.mrf.mxu0
    %v490 = vadd.f32 0.0, %v489
    %v491 = vpop.f32.mrf.mxu0
    %v492 = vadd.f32 0.0, %v491
    %493 = vmatmul.bf16.gmra.mxu0 %v350
    %v494 = vpop.f32.mrf.mxu0
    %v495 = vadd.f32 0.0, %v494
    %v496 = vpop.f32.mrf.mxu0
    %v497 = vadd.f32 0.0, %v496
    %498 = vmatmul.bf16.gmra.mxu0 %v353
    %v499 = vpop.f32.mrf.mxu0
    %v500 = vadd.f32 0.0, %v499
    %v501 = vpop.f32.mrf.mxu0
    %v502 = vadd.f32 0.0, %v501
    %503 = vmatmul.bf16.gmra.mxu0 %v356
    %v504 = vpop.f32.mrf.mxu0
    %v505 = vadd.f32 0.0, %v504
    %v506 = vpop.f32.mrf.mxu0
    %v507 = vadd.f32 0.0, %v506
    %508 = vmatmul.bf16.gmra.mxu0 %v359
    %v509 = vpop.f32.mrf.mxu0
    %v510 = vadd.f32 0.0, %v509
    %v511 = vpop.f32.mrf.mxu0
    %v512 = vadd.f32 0.0, %v511
    %513 = vmatmul.bf16.gmra.mxu0 %v362
    %v514 = vpop.f32.mrf.mxu0
    %v515 = vadd.f32 0.0, %v514
    %v516 = vpop.f32.mrf.mxu0
    %v517 = vadd.f32 0.0, %v516
    %518 = vmatmul.bf16.gmra.mxu0 %v365
    %v519 = vpop.f32.mrf.mxu0
    %v520 = vadd.f32 0.0, %v519
    %v521 = vpop.f32.mrf.mxu0
    %v522 = vadd.f32 0.0, %v521
    %523 = vmatmul.bf16.gmra.mxu0 %v368
    %v524 = vpop.f32.mrf.mxu0
    %v525 = vadd.f32 0.0, %v524
    %v526 = vpop.f32.mrf.mxu0
    %v527 = vadd.f32 0.0, %v526
    %528 = vmatmul.bf16.gmra.mxu0 %v371
    %v529 = vpop.f32.mrf.mxu0
    %v530 = vadd.f32 0.0, %v529
    %v531 = vpop.f32.mrf.mxu0
    %v532 = vadd.f32 0.0, %v531
    %533 = vmatmul.bf16.gmra.mxu0 %v374
    %v534 = vpop.f32.mrf.mxu0
    %v535 = vadd.f32 0.0, %v534
    %v536 = vpop.f32.mrf.mxu0
    %v537 = vadd.f32 0.0, %v536
    %538 = vmatmul.bf16.gmra.mxu0 %v377
    %v539 = vpop.f32.mrf.mxu0
    %v540 = vadd.f32 0.0, %v539
    %v541 = vpop.f32.mrf.mxu0
    %v542 = vadd.f32 0.0, %v541
    %543 = vmatmul.bf16.gmra.mxu0 %v380
    %v544 = vpop.f32.mrf.mxu0
    %v545 = vadd.f32 0.0, %v544
    %v546 = vpop.f32.mrf.mxu0
    %v547 = vadd.f32 0.0, %v546
    %548 = vmatmul.bf16.gmra.mxu0 %v383
    %v549 = vpop.f32.mrf.mxu0
    %v550 = vadd.f32 0.0, %v549
    %v551 = vpop.f32.mrf.mxu0
    %v552 = vadd.f32 0.0, %v551
    %553 = vdwg.mxu0
    %554 = vmatpush.bf16.msra.mxu0 0
    %555 = vmatpush.bf16.msra.mxu0 0
    %556 = vmatpush.bf16.msra.mxu0 0
    %557 = vmatpush.bf16.msra.mxu0 0
    %558 = vmatpush.bf16.msra.mxu0 %v279
    %559 = vmatpush.bf16.msra.mxu0 %v277
    %560 = vmatpush.bf16.msra.mxu0 %v275
    %561 = vmatpush.bf16.msra.mxu0 %v273
    %562 = vmatmul.bf16.gmra.mxu0 %v290
    %v563 = vpop.f32.mrf.mxu0
    %v564 = vadd.f32 0.0, %v563
    %v565 = vpop.f32.mrf.mxu0
    %v566 = vadd.f32 0.0, %v565
    %567 = vmatmul.bf16.gmra.mxu0 %v293
    %v568 = vpop.f32.mrf.mxu0
    %v569 = vadd.f32 0.0, %v568
    %v570 = vpop.f32.mrf.mxu0
    %v571 = vadd.f32 0.0, %v570
    %572 = vmatmul.bf16.gmra.mxu0 %v296
    %v573 = vpop.f32.mrf.mxu0
    %v574 = vadd.f32 0.0, %v573
    %v575 = vpop.f32.mrf.mxu0
    %v576 = vadd.f32 0.0, %v575
    %577 = vmatmul.bf16.gmra.mxu0 %v299
    %v578 = vpop.f32.mrf.mxu0
    %v579 = vadd.f32 0.0, %v578
    %v580 = vpop.f32.mrf.mxu0
    %v581 = vadd.f32 0.0, %v580
    %582 = vmatmul.bf16.gmra.mxu0 %v302
    %v583 = vpop.f32.mrf.mxu0
    %v584 = vadd.f32 0.0, %v583
    %v585 = vpop.f32.mrf.mxu0
    %v586 = vadd.f32 0.0, %v585
    %587 = vmatmul.bf16.gmra.mxu0 %v305
    %v588 = vpop.f32.mrf.mxu0
    %v589 = vadd.f32 0.0, %v588
    %v590 = vpop.f32.mrf.mxu0
    %v591 = vadd.f32 0.0, %v590
    %592 = vmatmul.bf16.gmra.mxu0 %v308
    %v593 = vpop.f32.mrf.mxu0
    %v594 = vadd.f32 0.0, %v593
    %v595 = vpop.f32.mrf.mxu0
    %v596 = vadd.f32 0.0, %v595
    %597 = vmatmul.bf16.gmra.mxu0 %v311
    %v598 = vpop.f32.mrf.mxu0
    %v599 = vadd.f32 0.0, %v598
    %v600 = vpop.f32.mrf.mxu0
    %v601 = vadd.f32 0.0, %v600
    %602 = vmatmul.bf16.gmra.mxu0 %v314
    %v603 = vpop.f32.mrf.mxu0
    %v604 = vadd.f32 0.0, %v603
    %v605 = vpop.f32.mrf.mxu0
    %v606 = vadd.f32 0.0, %v605
    %607 = vmatmul.bf16.gmra.mxu0 %v317
    %v608 = vpop.f32.mrf.mxu0
    %v609 = vadd.f32 0.0, %v608
    %v610 = vpop.f32.mrf.mxu0
    %v611 = vadd.f32 0.0, %v610
    %612 = vmatmul.bf16.gmra.mxu0 %v320
    %v613 = vpop.f32.mrf.mxu0
    %v614 = vadd.f32 0.0, %v613
    %v615 = vpop.f32.mrf.mxu0
    %v616 = vadd.f32 0.0, %v615
    %617 = vmatmul.bf16.gmra.mxu0 %v323
    %v618 = vpop.f32.mrf.mxu0
    %v619 = vadd.f32 0.0, %v618
    %v620 = vpop.f32.mrf.mxu0
    %v621 = vadd.f32 0.0, %v620
    %622 = vmatmul.bf16.gmra.mxu0 %v326
    %v623 = vpop.f32.mrf.mxu0
    %v624 = vadd.f32 0.0, %v623
    %v625 = vpop.f32.mrf.mxu0
    %v626 = vadd.f32 0.0, %v625
    %627 = vmatmul.bf16.gmra.mxu0 %v329
    %v628 = vpop.f32.mrf.mxu0
    %v629 = vadd.f32 0.0, %v628
    %v630 = vpop.f32.mrf.mxu0
    %v631 = vadd.f32 0.0, %v630
    %632 = vmatmul.bf16.gmra.mxu0 %v332
    %v633 = vpop.f32.mrf.mxu0
    %v634 = vadd.f32 0.0, %v633
    %v635 = vpop.f32.mrf.mxu0
    %v636 = vadd.f32 0.0, %v635
    %637 = vmatmul.bf16.gmra.mxu0 %v335
    %v638 = vpop.f32.mrf.mxu0
    %v639 = vadd.f32 0.0, %v638
    %v640 = vpop.f32.mrf.mxu0
    %v641 = vadd.f32 0.0, %v640
    %642 = vmatmul.bf16.gmra.mxu0 %v338
    %v643 = vpop.f32.mrf.mxu0
    %v644 = vadd.f32 0.0, %v643
    %v645 = vpop.f32.mrf.mxu0
    %v646 = vadd.f32 0.0, %v645
    %647 = vmatmul.bf16.gmra.mxu0 %v341
    %v648 = vpop.f32.mrf.mxu0
    %v649 = vadd.f32 0.0, %v648
    %v650 = vpop.f32.mrf.mxu0
    %v651 = vadd.f32 0.0, %v650
    %652 = vmatmul.bf16.gmra.mxu0 %v344
    %v653 = vpop.f32.mrf.mxu0
    %v654 = vadd.f32 0.0, %v653
    %v655 = vpop.f32.mrf.mxu0
    %v656 = vadd.f32 0.0, %v655
    %657 = vmatmul.bf16.gmra.mxu0 %v347
    %v658 = vpop.f32.mrf.mxu0
    %v659 = vadd.f32 0.0, %v658
    %v660 = vpop.f32.mrf.mxu0
    %v661 = vadd.f32 0.0, %v660
    %662 = vmatmul.bf16.gmra.mxu0 %v350
    %v663 = vpop.f32.mrf.mxu0
    %v664 = vadd.f32 0.0, %v663
    %v665 = vpop.f32.mrf.mxu0
    %v666 = vadd.f32 0.0, %v665
    %667 = vmatmul.bf16.gmra.mxu0 %v353
    %v668 = vpop.f32.mrf.mxu0
    %v669 = vadd.f32 0.0, %v668
    %v670 = vpop.f32.mrf.mxu0
    %v671 = vadd.f32 0.0, %v670
    %672 = vmatmul.bf16.gmra.mxu0 %v356
    %v673 = vpop.f32.mrf.mxu0
    %v674 = vadd.f32 0.0, %v673
    %v675 = vpop.f32.mrf.mxu0
    %v676 = vadd.f32 0.0, %v675
    %677 = vmatmul.bf16.gmra.mxu0 %v359
    %v678 = vpop.f32.mrf.mxu0
    %v679 = vadd.f32 0.0, %v678
    %v680 = vpop.f32.mrf.mxu0
    %v681 = vadd.f32 0.0, %v680
    %682 = vmatmul.bf16.gmra.mxu0 %v362
    %v683 = vpop.f32.mrf.mxu0
    %v684 = vadd.f32 0.0, %v683
    %v685 = vpop.f32.mrf.mxu0
    %v686 = vadd.f32 0.0, %v685
    %687 = vmatmul.bf16.gmra.mxu0 %v365
    %v688 = vpop.f32.mrf.mxu0
    %v689 = vadd.f32 0.0, %v688
    %v690 = vpop.f32.mrf.mxu0
    %v691 = vadd.f32 0.0, %v690
    %692 = vmatmul.bf16.gmra.mxu0 %v368
    %v693 = vpop.f32.mrf.mxu0
    %v694 = vadd.f32 0.0, %v693
    %v695 = vpop.f32.mrf.mxu0
    %v696 = vadd.f32 0.0, %v695
    %697 = vmatmul.bf16.gmra.mxu0 %v371
    %v698 = vpop.f32.mrf.mxu0
    %v699 = vadd.f32 0.0, %v698
    %v700 = vpop.f32.mrf.mxu0
    %v701 = vadd.f32 0.0, %v700
    %702 = vmatmul.bf16.gmra.mxu0 %v374
    %v703 = vpop.f32.mrf.mxu0
    %v704 = vadd.f32 0.0, %v703
    %v705 = vpop.f32.mrf.mxu0
    %v706 = vadd.f32 0.0, %v705
    %707 = vmatmul.bf16.gmra.mxu0 %v377
    %v708 = vpop.f32.mrf.mxu0
    %v709 = vadd.f32 0.0, %v708
    %v710 = vpop.f32.mrf.mxu0
    %v711 = vadd.f32 0.0, %v710
    %712 = vmatmul.bf16.gmra.mxu0 %v380
    %v713 = vpop.f32.mrf.mxu0
    %v714 = vadd.f32 0.0, %v713
    %v715 = vpop.f32.mrf.mxu0
    %v716 = vadd.f32 0.0, %v715
    %717 = vmatmul.bf16.gmra.mxu0 %v383
    %v718 = vpop.f32.mrf.mxu0
    %v719 = vadd.f32 0.0, %v718
    %v720 = vpop.f32.mrf.mxu0
    %v721 = vadd.f32 0.0, %v720
    %722 = vdwg.mxu0
    %v723 = vpack.c.bf16 %v395, %v395
    %v724 = vpack.c.bf16 %v397, %v397
    %v725 = vpack.c.bf16 %v400, %v400
    %v726 = vpack.c.bf16 %v402, %v402
    %v727 = vpack.c.bf16 %v405, %v405
    %v728 = vpack.c.bf16 %v407, %v407
    %v729 = vpack.c.bf16 %v410, %v410
    %v730 = vpack.c.bf16 %v412, %v412
    %v731 = vpack.c.bf16 %v415, %v415
    %v732 = vpack.c.bf16 %v417, %v417
    %v733 = vpack.c.bf16 %v420, %v420
    %v734 = vpack.c.bf16 %v422, %v422
    %v735 = vpack.c.bf16 %v425, %v425
    %v736 = vpack.c.bf16 %v427, %v427
    %v737 = vpack.c.bf16 %v430, %v430
    %v738 = vpack.c.bf16 %v432, %v432
    %v739 = vpack.c.bf16 %v435, %v435
    %v740 = vpack.c.bf16 %v437, %v437
    %v741 = vpack.c.bf16 %v440, %v440
    %v742 = vpack.c.bf16 %v442, %v442
    %v743 = vpack.c.bf16 %v445, %v445
    %v744 = vpack.c.bf16 %v447, %v447
    %v745 = vpack.c.bf16 %v450, %v450
    %v746 = vpack.c.bf16 %v452, %v452
    %v747 = vpack.c.bf16 %v455, %v455
    %v748 = vpack.c.bf16 %v457, %v457
    %v749 = vpack.c.bf16 %v460, %v460
    %v750 = vpack.c.bf16 %v462, %v462
    %v751 = vpack.c.bf16 %v465, %v465
    %v752 = vpack.c.bf16 %v467, %v467
    %v753 = vpack.c.bf16 %v470, %v470
    %v754 = vpack.c.bf16 %v472, %v472
    %v755 = vpack.c.bf16 %v475, %v475
    %v756 = vpack.c.bf16 %v477, %v477
    %v757 = vpack.c.bf16 %v480, %v480
    %v758 = vpack.c.bf16 %v482, %v482
    %v759 = vpack.c.bf16 %v485, %v485
    %v760 = vpack.c.bf16 %v487, %v487
    %v761 = vpack.c.bf16 %v490, %v490
    %v762 = vpack.c.bf16 %v492, %v492
    %v763 = vpack.c.bf16 %v495, %v495
    %v764 = vpack.c.bf16 %v497, %v497
    %v765 = vpack.c.bf16 %v500, %v500
    %v766 = vpack.c.bf16 %v502, %v502
    %v767 = vpack.c.bf16 %v505, %v505
    %v768 = vpack.c.bf16 %v507, %v507
    %v769 = vpack.c.bf16 %v510, %v510
    %v770 = vpack.c.bf16 %v512, %v512
    %v771 = vpack.c.bf16 %v515, %v515
    %v772 = vpack.c.bf16 %v517, %v517
    %v773 = vpack.c.bf16 %v520, %v520
    %v774 = vpack.c.bf16 %v522, %v522
    %v775 = vpack.c.bf16 %v525, %v525
    %v776 = vpack.c.bf16 %v527, %v527
    %v777 = vpack.c.bf16 %v530, %v530
    %v778 = vpack.c.bf16 %v532, %v532
    %v779 = vpack.c.bf16 %v535, %v535
    %v780 = vpack.c.bf16 %v537, %v537
    %v781 = vpack.c.bf16 %v540, %v540
    %v782 = vpack.c.bf16 %v542, %v542
    %v783 = vpack.c.bf16 %v545, %v545
    %v784 = vpack.c.bf16 %v547, %v547
    %v785 = vpack.c.bf16 %v550, %v550
    %v786 = vpack.c.bf16 %v552, %v552
    %787 = vst [vmem:[#allocation2] sm:$0xf] %v723
    %788 = vst [vmem:[#allocation2 + $0x4] sm:$0xf] %v724
    %789 = vst [vmem:[#allocation2 + $0x8] sm:$0xf] %v725
    %790 = vst [vmem:[#allocation2 + $0xc] sm:$0xf] %v726
    %791 = vst [vmem:[#allocation2 + $0x10] sm:$0xf] %v727
    %792 = vst [vmem:[#allocation2 + $0x14] sm:$0xf] %v728
    %793 = vst [vmem:[#allocation2 + $0x18] sm:$0xf] %v729
    %794 = vst [vmem:[#allocation2 + $0x1c] sm:$0xf] %v730
    %795 = vst [vmem:[#allocation2 + $0x20] sm:$0xf] %v731
    %796 = vst [vmem:[#allocation2 + $0x24] sm:$0xf] %v732
    %797 = vst [vmem:[#allocation2 + $0x28] sm:$0xf] %v733
    %798 = vst [vmem:[#allocation2 + $0x2c] sm:$0xf] %v734
    %799 = vst [vmem:[#allocation2 + $0x30] sm:$0xf] %v735
    %800 = vst [vmem:[#allocation2 + $0x34] sm:$0xf] %v736
    %801 = vst [vmem:[#allocation2 + $0x38] sm:$0xf] %v737
    %802 = vst [vmem:[#allocation2 + $0x3c] sm:$0xf] %v738
    %803 = vst [vmem:[#allocation2 + $0x40] sm:$0xf] %v739
    %804 = vst [vmem:[#allocation2 + $0x44] sm:$0xf] %v740
    %805 = vst [vmem:[#allocation2 + $0x48] sm:$0xf] %v741
    %806 = vst [vmem:[#allocation2 + $0x4c] sm:$0xf] %v742
    %807 = vst [vmem:[#allocation2 + $0x50] sm:$0xf] %v743
    %808 = vst [vmem:[#allocation2 + $0x54] sm:$0xf] %v744
    %809 = vst [vmem:[#allocation2 + $0x58] sm:$0xf] %v745
    %810 = vst [vmem:[#allocation2 + $0x5c] sm:$0xf] %v746
    %811 = vst [vmem:[#allocation2 + $0x60] sm:$0xf] %v747
    %812 = vst [vmem:[#allocation2 + $0x64] sm:$0xf] %v748
    %813 = vst [vmem:[#allocation2 + $0x68] sm:$0xf] %v749
    %814 = vst [vmem:[#allocation2 + $0x6c] sm:$0xf] %v750
    %815 = vst [vmem:[#allocation2 + $0x70] sm:$0xf] %v751
    %816 = vst [vmem:[#allocation2 + $0x74] sm:$0xf] %v752
    %817 = vst [vmem:[#allocation2 + $0x78] sm:$0xf] %v753
    %818 = vst [vmem:[#allocation2 + $0x7c] sm:$0xf] %v754
    %819 = vst [vmem:[#allocation2 + $0x80] sm:$0xf] %v755
    %820 = vst [vmem:[#allocation2 + $0x84] sm:$0xf] %v756
    %821 = vst [vmem:[#allocation2 + $0x88] sm:$0xf] %v757
    %822 = vst [vmem:[#allocation2 + $0x8c] sm:$0xf] %v758
    %823 = vst [vmem:[#allocation2 + $0x90] sm:$0xf] %v759
    %824 = vst [vmem:[#allocation2 + $0x94] sm:$0xf] %v760
    %825 = vst [vmem:[#allocation2 + $0x98] sm:$0xf] %v761
    %826 = vst [vmem:[#allocation2 + $0x9c] sm:$0xf] %v762
    %827 = vst [vmem:[#allocation2 + $0xa0] sm:$0xf] %v763
    %828 = vst [vmem:[#allocation2 + $0xa4] sm:$0xf] %v764
    %829 = vst [vmem:[#allocation2 + $0xa8] sm:$0xf] %v765
    %830 = vst [vmem:[#allocation2 + $0xac] sm:$0xf] %v766
    %831 = vst [vmem:[#allocation2 + $0xb0] sm:$0xf] %v767
    %832 = vst [vmem:[#allocation2 + $0xb4] sm:$0xf] %v768
    %833 = vst [vmem:[#allocation2 + $0xb8] sm:$0xf] %v769
    %834 = vst [vmem:[#allocation2 + $0xbc] sm:$0xf] %v770
    %835 = vst [vmem:[#allocation2 + $0xc0] sm:$0xf] %v771
    %836 = vst [vmem:[#allocation2 + $0xc4] sm:$0xf] %v772
    %837 = vst [vmem:[#allocation2 + $0xc8] sm:$0xf] %v773
    %838 = vst [vmem:[#allocation2 + $0xcc] sm:$0xf] %v774
    %839 = vst [vmem:[#allocation2 + $0xd0] sm:$0xf] %v775
    %840 = vst [vmem:[#allocation2 + $0xd4] sm:$0xf] %v776
    %841 = vst [vmem:[#allocation2 + $0xd8] sm:$0xf] %v777
    %842 = vst [vmem:[#allocation2 + $0xdc] sm:$0xf] %v778
    %843 = vst [vmem:[#allocation2 + $0xe0] sm:$0xf] %v779
    %844 = vst [vmem:[#allocation2 + $0xe4] sm:$0xf] %v780
    %845 = vst [vmem:[#allocation2 + $0xe8] sm:$0xf] %v781
    %846 = vst [vmem:[#allocation2 + $0xec] sm:$0xf] %v782
    %847 = vst [vmem:[#allocation2 + $0xf0] sm:$0xf] %v783
    %848 = vst [vmem:[#allocation2 + $0xf4] sm:$0xf] %v784
    %849 = vst [vmem:[#allocation2 + $0xf8] sm:$0xf] %v785
    %850 = vst [vmem:[#allocation2 + $0xfc] sm:$0xf] %v786
    %851 = vst [vmem:[#allocation4] sm:$0xff] %v564
    %852 = vst [vmem:[#allocation4 + $0x8] sm:$0xff] %v566
    %853 = vst [vmem:[#allocation4 + $0x10] sm:$0xff] %v569
    %854 = vst [vmem:[#allocation4 + $0x18] sm:$0xff] %v571
    %855 = vst [vmem:[#allocation4 + $0x20] sm:$0xff] %v574
    %856 = vst [vmem:[#allocation4 + $0x28] sm:$0xff] %v576
    %857 = vst [vmem:[#allocation4 + $0x30] sm:$0xff] %v579
    %858 = vst [vmem:[#allocation4 + $0x38] sm:$0xff] %v581
    %859 = vst [vmem:[#allocation4 + $0x40] sm:$0xff] %v584
    %860 = vst [vmem:[#allocation4 + $0x48] sm:$0xff] %v586
    %861 = vst [vmem:[#allocation4 + $0x50] sm:$0xff] %v589
    %862 = vst [vmem:[#allocation4 + $0x58] sm:$0xff] %v591
    %863 = vst [vmem:[#allocation4 + $0x60] sm:$0xff] %v594
    %864 = vst [vmem:[#allocation4 + $0x68] sm:$0xff] %v596
    %865 = vst [vmem:[#allocation4 + $0x70] sm:$0xff] %v599
    %866 = vst [vmem:[#allocation4 + $0x78] sm:$0xff] %v601
    %867 = vst [vmem:[#allocation4 + $0x80] sm:$0xff] %v604
    %868 = vst [vmem:[#allocation4 + $0x88] sm:$0xff] %v606
    %869 = vst [vmem:[#allocation4 + $0x90] sm:$0xff] %v609
    %870 = vst [vmem:[#allocation4 + $0x98] sm:$0xff] %v611
    %871 = vst [vmem:[#allocation4 + $0xa0] sm:$0xff] %v614
    %872 = vst [vmem:[#allocation4 + $0xa8] sm:$0xff] %v616
    %873 = vst [vmem:[#allocation4 + $0xb0] sm:$0xff] %v619
    %874 = vst [vmem:[#allocation4 + $0xb8] sm:$0xff] %v621
    %875 = vst [vmem:[#allocation4 + $0xc0] sm:$0xff] %v624
    %876 = vst [vmem:[#allocation4 + $0xc8] sm:$0xff] %v626
    %877 = vst [vmem:[#allocation4 + $0xd0] sm:$0xff] %v629
    %878 = vst [vmem:[#allocation4 + $0xd8] sm:$0xff] %v631
    %879 = vst [vmem:[#allocation4 + $0xe0] sm:$0xff] %v634
    %880 = vst [vmem:[#allocation4 + $0xe8] sm:$0xff] %v636
    %881 = vst [vmem:[#allocation4 + $0xf0] sm:$0xff] %v639
    %882 = vst [vmem:[#allocation4 + $0xf8] sm:$0xff] %v641
    %883 = vst [vmem:[#allocation4 + $0x100] sm:$0xff] %v644
    %884 = vst [vmem:[#allocation4 + $0x108] sm:$0xff] %v646
    %885 = vst [vmem:[#allocation4 + $0x110] sm:$0xff] %v649
    %886 = vst [vmem:[#allocation4 + $0x118] sm:$0xff] %v651
    %887 = vst [vmem:[#allocation4 + $0x120] sm:$0xff] %v654
    %888 = vst [vmem:[#allocation4 + $0x128] sm:$0xff] %v656
    %889 = vst [vmem:[#allocation4 + $0x130] sm:$0xff] %v659
    %890 = vst [vmem:[#allocation4 + $0x138] sm:$0xff] %v661
    %891 = vst [vmem:[#allocation4 + $0x140] sm:$0xff] %v664
    %892 = vst [vmem:[#allocation4 + $0x148] sm:$0xff] %v666
    %893 = vst [vmem:[#allocation4 + $0x150] sm:$0xff] %v669
    %894 = vst [vmem:[#allocation4 + $0x158] sm:$0xff] %v671
    %895 = vst [vmem:[#allocation4 + $0x160] sm:$0xff] %v674
    %896 = vst [vmem:[#allocation4 + $0x168] sm:$0xff] %v676
    %897 = vst [vmem:[#allocation4 + $0x170] sm:$0xff] %v679
    %898 = vst [vmem:[#allocation4 + $0x178] sm:$0xff] %v681
    %899 = vst [vmem:[#allocation4 + $0x180] sm:$0xff] %v684
    %900 = vst [vmem:[#allocation4 + $0x188] sm:$0xff] %v686
    %901 = vst [vmem:[#allocation4 + $0x190] sm:$0xff] %v689
    %902 = vst [vmem:[#allocation4 + $0x198] sm:$0xff] %v691
    %903 = vst [vmem:[#allocation4 + $0x1a0] sm:$0xff] %v694
    %904 = vst [vmem:[#allocation4 + $0x1a8] sm:$0xff] %v696
    %905 = vst [vmem:[#allocation4 + $0x1b0] sm:$0xff] %v699
    %906 = vst [vmem:[#allocation4 + $0x1b8] sm:$0xff] %v701
    %907 = vst [vmem:[#allocation4 + $0x1c0] sm:$0xff] %v704
    %908 = vst [vmem:[#allocation4 + $0x1c8] sm:$0xff] %v706
    %909 = vst [vmem:[#allocation4 + $0x1d0] sm:$0xff] %v709
    %910 = vst [vmem:[#allocation4 + $0x1d8] sm:$0xff] %v711
    %911 = vst [vmem:[#allocation4 + $0x1e0] sm:$0xff] %v714
    %912 = vst [vmem:[#allocation4 + $0x1e8] sm:$0xff] %v716
    %913 = vst [vmem:[#allocation4 + $0x1f0] sm:$0xff] %v719
    %914 = vst [vmem:[#allocation4 + $0x1f8] sm:$0xff] %v721
    // Predicated region
    $region10: #{tpu_custom_call.1} parent=1 // pred_check
      _
    $region11: #{tpu_custom_call.1} parent=1 // pred_check_branch
      %916 = sbr.rel (0) target = $region13
    $region12: #{tpu_custom_call.1} parent=1 // pred_region
      %918 = vsyncadd [#allocation3], 0
      %s919 = sshll.u32 [#allocation2], 4
      %s920 = int_to_ptr.vmem [resolvable:$true] %s919
      %s921 = sshll.u32 %s2, 4
      %s922 = int_to_ptr.hbm [resolvable:$true] %s921
      %927 = dma.vmem_to_hbm [thread:$0]  %s920, 4096, %s922, [#allocation3], 64, 64, 4
    $region13: #{tpu_custom_call.1} parent=1 // pred_fallthru
      _
    // Predicated region
    $region14: #{tpu_custom_call.1} parent=1 // pred_check
      _
    $region15: #{tpu_custom_call.1} parent=1 // pred_check_branch
      %929 = sbr.rel (0) target = $region17
    $region16: #{tpu_custom_call.1} parent=1 // pred_region
      %931 = vsyncadd [#allocation5], 0
      %s932 = sshll.u32 [#allocation4], 4
      %s933 = int_to_ptr.vmem [resolvable:$true] %s932
      %s934 = sshll.u32 %s3, 4
      %s935 = int_to_ptr.hbm [resolvable:$true] %s934
      %940 = dma.vmem_to_hbm [thread:$0]  %s933, 8192, %s935, [#allocation5], 128, 128, 8
    $region17: #{tpu_custom_call.1} parent=1 // pred_fallthru
      _
    // Predicated region
    $region18: #{tpu_custom_call.1} parent=1 // pred_check
      _
    $region19: #{tpu_custom_call.1} parent=1 // pred_check_branch
      %942 = sbr.rel (0) target = $region21
    $region20: #{tpu_custom_call.1} parent=1 // pred_region
      %944 = dma.done [#allocation3], 4096
    $region21: #{tpu_custom_call.1} parent=1 // pred_fallthru
      _
    // Predicated region
    $region22: #{tpu_custom_call.1} parent=1 // pred_check
      _
    $region23: #{tpu_custom_call.1} parent=1 // pred_check_branch
      %946 = sbr.rel (0) target = $region25
    $region24: #{tpu_custom_call.1} parent=1 // pred_region
      %948 = dma.done [#allocation5], 8192
    $region25: #{tpu_custom_call.1} parent=1 // pred_fallthru
      _
    %949 = vsyncpa [#allocation3], 1
    %950 = vsyncpa [#allocation5], 1

</llo_original>
